<compile_context>
chip_gen: v6e
topology: v6e:2x2x1
jax: 0.10.0
libtpu: 0.0.40
codegen_flags: <defaults>
</compile_context>

<pallas_src>
import functools
import math

import jax
import jax.numpy as jnp
from jax.experimental import pallas as pl
from jax.experimental.pallas import tpu as pltpu


def _layernorm_kernel(x_ref, gamma_ref, beta_ref, o_ref, *, eps, d_hid, approx):
    x = x_ref[...].astype(jnp.float32)                       # (tm, D)

    # One-pass moments: the two cross-lane (XLU) reductions are independent,
    # so they can overlap instead of serializing mean -> centered -> sumsq.
    s = jnp.sum(x, axis=-1, keepdims=True)                   # (tm, 1)
    sq = jnp.sum(x * x, axis=-1, keepdims=True)              # (tm, 1)
    mean = s * (1.0 / d_hid)
    # torch.std default: unbiased estimator (divide by N-1). Matches torch,
    # including NaN/Inf behaviour if d_hid == 1.
    var = (sq - s * mean) / (d_hid - 1)
    var = jnp.maximum(var, 0.0)          # guard tiny negatives from cancellation
    std = jnp.sqrt(var)

    # Per-row reciprocal of (std + eps) on the (tm, 1) column (EUP slot), then
    # a cheap broadcast multiply — 1/D the divide work of a (tm, D) divide.
    inv = pl.reciprocal(std + eps, approx=approx)

    gamma = gamma_ref[...].astype(jnp.float32)               # (1, D)
    beta = beta_ref[...].astype(jnp.float32)                 # (1, D)
    o_ref[...] = ((x - mean) * inv * gamma + beta).astype(o_ref.dtype)


def _round_up(x, m):
    return ((x + m - 1) // m) * m


def _vmem_capacity_bytes():
    try:
        return int(pltpu.get_tpu_info().vmem_capacity_bytes)
    except Exception:
        return 64 << 20  # conservative fallback (v7x per-TensorCore VMEM)


def _pick_row_tile(rows, d_hid, in_itemsize, out_itemsize, vmem_cap):
    """Largest row tile whose input block is a few MiB, fitting the VMEM budget."""
    row_bytes = d_hid * max(in_itemsize, out_itemsize)
    # ~4 MiB per input block, scaled down if the chip's VMEM is small (v7x).
    target_block = max(1 << 20, min(4 << 20, vmem_cap // 16))
    tm = max(8, target_block // max(row_bytes, 1))
    tm = (tm // 8) * 8
    # Keep the grid >= 2 steps when there is enough work so both v7x
    # TensorCores are fed and the DMA pipeline actually overlaps.
    if rows > 16:
        tm = min(tm, max(8, (((rows + 1) // 2) // 8) * 8))
    tm = min(tm, _round_up(rows, 8))
    return max(8, int(tm))


def layer_normalization(z, gamma, beta, eps=1e-3, row_tile=None,
                        approx_reciprocal=True):
    """z: (..., d_hid); gamma/beta: (d_hid,). Returns same shape/dtype as z.

    For peak throughput d_hid should be a multiple of 128 (lane-dense last dim);
    smaller d_hid is correct but wastes lane bandwidth on every load/store.
    """
    orig_shape = z.shape
    d_hid = orig_shape[-1]
    rows = int(math.prod(orig_shape[:-1]))
    x2d = z.reshape(rows, d_hid)
    gamma2d = jnp.asarray(gamma).reshape(1, d_hid)
    beta2d = jnp.asarray(beta).reshape(1, d_hid)

    vmem_cap = _vmem_capacity_bytes()
    in_itemsize = x2d.dtype.itemsize
    out_itemsize = jnp.dtype(z.dtype).itemsize
    if row_tile is None:
        tm = _pick_row_tile(rows, d_hid, in_itemsize, out_itemsize, vmem_cap)
    else:
        tm = max(8, (int(row_tile) // 8) * 8)

    # Pad rows to a multiple of the tile instead of forcing a tiny tile.
    padded_rows = _round_up(rows, tm)
    if padded_rows != rows:
        # Zero rows normalize to zero ((0 - 0) * 1/eps = 0) and are sliced off.
        x2d = jnp.pad(x2d, ((0, padded_rows - rows), (0, 0)))

    grid = (padded_rows // tm,)

    # Scoped-VMEM budget: double-buffered (input + output) blocks + params + headroom.
    block_bytes = tm * d_hid * (in_itemsize + out_itemsize)
    needed = 2 * block_bytes + 4 * d_hid * 4 + (8 << 20)
    vmem_limit = int(min(vmem_cap, max(needed, 32 << 20)))

    kernel = functools.partial(
        _layernorm_kernel, eps=float(eps), d_hid=d_hid, approx=approx_reciprocal)

    out = pl.pallas_call(
        kernel,
        out_shape=jax.ShapeDtypeStruct((padded_rows, d_hid), z.dtype),
        grid_spec=pltpu.PrefetchScalarGridSpec(
            num_scalar_prefetch=0,
            grid=grid,
            in_specs=[
                pl.BlockSpec((tm, d_hid), lambda i: (i, 0)),
                pl.BlockSpec((1, d_hid), lambda i: (0, 0)),
                pl.BlockSpec((1, d_hid), lambda i: (0, 0)),
            ],
            out_specs=pl.BlockSpec((tm, d_hid), lambda i: (i, 0)),
        ),
        compiler_params=pltpu.CompilerParams(
            dimension_semantics=("parallel",),
            vmem_limit_bytes=vmem_limit,
        ),
    )(x2d, gamma2d, beta2d)

    if padded_rows != rows:
        out = out[:rows]
    return out.reshape(orig_shape)


def _reference(z, gamma, beta, eps=1e-3):
    z32 = z.astype(jnp.float32)
    mean = jnp.mean(z32, axis=-1, keepdims=True)
    # Unbiased std, matching torch.std default.
    var = jnp.sum((z32 - mean) ** 2, axis=-1, keepdims=True) / (z32.shape[-1] - 1)
    std = jnp.sqrt(var)
    return (gamma * (z32 - mean) / (std + eps) + beta).astype(z.dtype)


if __name__ == "__main__":
    key = jax.random.PRNGKey(0)

    # Module-implied small shapes: (batch, seq, d_hid), LN over d_hid.
    batch, seq, d_hid = 2, 8, 32
    gamma = jnp.ones((d_hid,), dtype=jnp.float32)   # torch.ones(d_hid)
    beta = jnp.zeros((d_hid,), dtype=jnp.float32)   # torch.zeros(d_hid)
    z = jax.random.normal(key, (batch, seq, d_hid), dtype=jnp.float32)

    # Exact path: matches the reference tightly.
    out_exact = jax.block_until_ready(
        layer_normalization(z, gamma, beta, eps=1e-3, approx_reciprocal=False))
    ref = _reference(z, gamma, beta, eps=1e-3)
    assert out_exact.shape == z.shape and out_exact.dtype == z.dtype
    assert jnp.allclose(out_exact, ref, atol=1e-4, rtol=1e-4), "exact path mismatch"

    # Default fast path (EUP approximate reciprocal): ~1e-3-level relative error.
    out_fast = jax.block_until_ready(layer_normalization(z, gamma, beta, eps=1e-3))
    assert jnp.allclose(out_fast, ref, atol=1e-2, rtol=1e-2), "approx path mismatch"

    # Larger lane-dense check that also exercises row padding (130 rows is not a
    # multiple of the auto-picked tile) and a >=2-step grid for v7x megacore.
    b2, s2, d2 = 2, 65, 256
    g2 = jnp.ones((d2,), jnp.float32)
    bt2 = jnp.zeros((d2,), jnp.float32)
    z2 = jax.random.normal(jax.random.PRNGKey(0), (b2, s2, d2), dtype=jnp.float32)
    out2 = jax.block_until_ready(
        layer_normalization(z2, g2, bt2, eps=1e-3, approx_reciprocal=False))
    ref2 = _reference(z2, g2, bt2, eps=1e-3)
    assert out2.shape == z2.shape
    assert jnp.allclose(out2, ref2, atol=1e-4, rtol=1e-4), "padded path mismatch"

    print("KERNEL_OK")
</pallas_src>

<mosaic_0001>
module attributes {stable_mosaic.version = 11 : i64} {
  func.func @_layernorm_kernel(%arg0: i32, %arg1: memref<16x32xf32, #tpu.memory_space<vmem>>, %arg2: memref<1x32xf32, #tpu.memory_space<vmem>>, %arg3: memref<1x32xf32, #tpu.memory_space<vmem>>, %arg4: memref<16x32xf32, #tpu.memory_space<vmem>>) attributes {dimension_semantics = [#tpu.dimension_semantics<parallel>], iteration_bounds = array<i64: 1>, scalar_prefetch = 0 : i64, scratch_operands = 0 : i64, tpu.core_type = #tpu.core_type<tc>, window_params = [{transform_indices = @transform_0, window_bounds = array<i64: 16, 32>}, {pipeline_mode = #tpu.pipeline_mode<synchronous>, transform_indices = @transform_1, window_bounds = array<i64: 1, 32>}, {pipeline_mode = #tpu.pipeline_mode<synchronous>, transform_indices = @transform_2, window_bounds = array<i64: 1, 32>}, {transform_indices = @transform_3, window_bounds = array<i64: 16, 32>}]} {
    %c0 = arith.constant 0 : index
    %c0_0 = arith.constant 0 : index
    %0 = vector.load %arg1[%c0, %c0_0] : memref<16x32xf32, #tpu.memory_space<vmem>>, vector<16x32xf32>
    %cst = arith.constant dense<0.000000e+00> : vector<16xf32>
    %1 = vector.multi_reduction <add>, %0, %cst [1] : vector<16x32xf32> to vector<16xf32>
    %2 = vector.shape_cast %1 : vector<16xf32> to vector<16x1xf32>
    %3 = arith.mulf %0, %0 : vector<16x32xf32>
    %cst_1 = arith.constant dense<0.000000e+00> : vector<16xf32>
    %4 = vector.multi_reduction <add>, %3, %cst_1 [1] : vector<16x32xf32> to vector<16xf32>
    %5 = vector.shape_cast %4 : vector<16xf32> to vector<16x1xf32>
    %cst_2 = arith.constant 3.125000e-02 : f32
    %6 = vector.broadcast %cst_2 : f32 to vector<16x1xf32>
    %7 = arith.mulf %2, %6 : vector<16x1xf32>
    %8 = arith.mulf %2, %7 : vector<16x1xf32>
    %9 = arith.subf %5, %8 : vector<16x1xf32>
    %cst_3 = arith.constant 3.100000e+01 : f32
    %10 = vector.broadcast %cst_3 : f32 to vector<16x1xf32>
    %11 = arith.divf %9, %10 : vector<16x1xf32>
    %cst_4 = arith.constant 0.000000e+00 : f32
    %12 = vector.broadcast %cst_4 : f32 to vector<16x1xf32>
    %13 = arith.maximumf %11, %12 : vector<16x1xf32>
    %14 = math.sqrt %13 : vector<16x1xf32>
    %cst_5 = arith.constant 1.000000e-03 : f32
    %15 = vector.broadcast %cst_5 : f32 to vector<16x1xf32>
    %16 = arith.addf %14, %15 : vector<16x1xf32>
    %17 = tpu.reciprocal %16 : vector<16x1xf32> -> vector<16x1xf32>
    %c0_6 = arith.constant 0 : index
    %c0_7 = arith.constant 0 : index
    %18 = vector.load %arg2[%c0_6, %c0_7] : memref<1x32xf32, #tpu.memory_space<vmem>>, vector<1x32xf32>
    %c0_8 = arith.constant 0 : index
    %c0_9 = arith.constant 0 : index
    %19 = vector.load %arg3[%c0_8, %c0_9] : memref<1x32xf32, #tpu.memory_space<vmem>>, vector<1x32xf32>
    %20 = vector.broadcast %7 : vector<16x1xf32> to vector<16x32xf32>
    %21 = arith.subf %0, %20 : vector<16x32xf32>
    %22 = vector.broadcast %17 : vector<16x1xf32> to vector<16x32xf32>
    %23 = arith.mulf %21, %22 : vector<16x32xf32>
    %24 = vector.broadcast %18 : vector<1x32xf32> to vector<16x32xf32>
    %25 = arith.mulf %23, %24 : vector<16x32xf32>
    %26 = vector.broadcast %19 : vector<1x32xf32> to vector<16x32xf32>
    %27 = arith.addf %25, %26 : vector<16x32xf32>
    %c0_10 = arith.constant 0 : index
    %c0_11 = arith.constant 0 : index
    %28 = vector.load %arg4[%c0_10, %c0_11] : memref<16x32xf32, #tpu.memory_space<vmem>>, vector<16x32xf32>
    tpu.vector_store %arg4[%c0_10, %c0_11], %27 {strides = array<i32>} : memref<16x32xf32, #tpu.memory_space<vmem>>, vector<16x32xf32>,
    return
  }
  func.func @transform_0(%arg0: i32) -> (i32, i32) {
    %c0_i32 = arith.constant 0 : i32
    %c0_i32_0 = arith.constant 0 : i32
    return %arg0, %c0_i32 : i32, i32
  }
  func.func @transform_1(%arg0: i32) -> (i32, i32) {
    %c0_i32 = arith.constant 0 : i32
    %c0_i32_0 = arith.constant 0 : i32
    %c0_i32_1 = arith.constant 0 : i32
    return %c0_i32, %c0_i32_0 : i32, i32
  }
  func.func @transform_2(%arg0: i32) -> (i32, i32) {
    %c0_i32 = arith.constant 0 : i32
    %c0_i32_0 = arith.constant 0 : i32
    %c0_i32_1 = arith.constant 0 : i32
    return %c0_i32, %c0_i32_0 : i32, i32
  }
  func.func @transform_3(%arg0: i32) -> (i32, i32) {
    %c0_i32 = arith.constant 0 : i32
    %c0_i32_0 = arith.constant 0 : i32
    return %arg0, %c0_i32 : i32, i32
  }
}

</mosaic_0001>

<llo_original>
// kernel: tpu_custom_call.1
$region0: #{tpu_custom_call.1}
  #allocation0 [shape = 'u32[]', space=smem, size = 0x4, offset = 0x4, fixed_abs, tag = 'smem constant byte address 0x4 - core index']
  #allocation1 [shape = 'u32[144,128]{1,0:T(1,128)}', space=vmem, size = 0x12000, scoped, tag = 'internal scratch']
  %s0 = inlined_call_operand.hbm [shape: f32[16,32], index: 0, kind: input, shape index: {}]
  %s1 = inlined_call_operand.vmem [shape: f32[1,32], index: 1, kind: input, shape index: {}]
  %s2 = inlined_call_operand.vmem [shape: f32[1,32], index: 2, kind: input, shape index: {}]
  %s3 = inlined_call_operand.hbm [shape: f32[16,32], index: 3, kind: output, shape index: {}]
  %s4 = sld [smem:[#allocation0]]
  $region26: #{tpu_custom_call.1} parent=0
    _
  %s6 = ssub.s32 1, %s4
  %s7 = scalar_select 0, %s6, %s4
  $region1: #{tpu_custom_call.1} parent=0
    #allocation2 [shape = 'u8[8192]{0}', space=vmem, size = 0x2000, scoped, tag = 'input window, operand 0, single buffered']
    #allocation3 [shape = 's32[1]{0}', space=sflag, size = 0x4, scoped, tag = 'scoped memory for tpu_custom_call.1']
    #allocation4 [shape = 's32[1]{0}', space=sflag, size = 0x4, scoped, tag = 'scoped memory for tpu_custom_call.1']
    #allocation5 [shape = 'u8[8192]{0}', space=vmem, size = 0x2000, scoped, tag = 'output window, operand 0, single buffered']
    %8 = vsyncpa [#allocation3], 0
    %9 = vsyncpa [#allocation4], 0
    // Predicated region
    $region2: #{tpu_custom_call.1} parent=1 // pred_check
      _
    $region3: #{tpu_custom_call.1} parent=1 // pred_check_branch
      %11 = sbr.rel (0) target = $region5
    $region4: #{tpu_custom_call.1} parent=1 // pred_region
      %s13 = ssub.s32 256, 256
      %14 = vsyncadd [#allocation3], %s13
      %s15 = sshll.u32 [#allocation2], 4
      %s16 = int_to_ptr.vmem [resolvable:$true] %s15
      %21 = dma.hbm_to_vmem [thread:$0]  %s0, 256, %s16, [#allocation3], 128, 128, 8
    $region5: #{tpu_custom_call.1} parent=1 // pred_fallthru
      _
    // Predicated region
    $region6: #{tpu_custom_call.1} parent=1 // pred_check
      _
    $region7: #{tpu_custom_call.1} parent=1 // pred_check_branch
      %23 = sbr.rel (0) target = $region9
    $region8: #{tpu_custom_call.1} parent=1 // pred_region
      _
    $region9: #{tpu_custom_call.1} parent=1 // pred_fallthru
      _
    // Predicated region
    $region10: #{tpu_custom_call.1} parent=1 // pred_check
      _
    $region11: #{tpu_custom_call.1} parent=1 // pred_check_branch
      %25 = sbr.rel (0) target = $region13
    $region12: #{tpu_custom_call.1} parent=1 // pred_region
      _
    $region13: #{tpu_custom_call.1} parent=1 // pred_fallthru
      _
    // Predicated region
    $region14: #{tpu_custom_call.1} parent=1 // pred_check
      _
    $region15: #{tpu_custom_call.1} parent=1 // pred_check_branch
      %27 = sbr.rel (0) target = $region17
    $region16: #{tpu_custom_call.1} parent=1 // pred_region
      %28 = dma.done [#allocation3], 256
    $region17: #{tpu_custom_call.1} parent=1 // pred_fallthru
      _
    %v29 = vld [vmem:[#allocation2] sm:$0xff]
    %v30 = vld [vmem:[#allocation2 + $0x8] sm:$0xff]
    %vm31 = vcmask 261120
    %v32 = vsel %vm31, %v29, 0.0
    %33 = vadd.xlane.f32.xlu0 %v32
    %v34 = vpop.xlane.xlu0 %33
    %v35 = vsel %vm31, %v30, 0.0
    %36 = vadd.xlane.f32.xlu0 %v35
    %v37 = vpop.xlane.xlu0 %36
    %v38 = vmul.f32 %v29, %v29
    %v39 = vmul.f32 %v30, %v30
    %v40 = vsel %vm31, %v38, 0.0
    %41 = vadd.xlane.f32.xlu0 %v40
    %v42 = vpop.xlane.xlu0 %41
    %v43 = vsel %vm31, %v39, 0.0
    %44 = vadd.xlane.f32.xlu0 %v43
    %v45 = vpop.xlane.xlu0 %44
    %v46 = vmul.f32 %v34, 0.03125
    %v47 = vmul.f32 %v37, 0.03125
    %v48 = vmul.f32 %v34, %v46
    %v49 = vmul.f32 %v37, %v47
    %v50 = vsub.f32 %v42, %v48
    %v51 = vsub.f32 %v45, %v49
    %v52 = vrcp.pop 31.0
    %v53 = vmul.f32 %v50, %v52
    %v54 = vmul.f32 %v51, %v52
    %v55 = vmax.f32 %v53, 0.0
    %v56 = vmax.f32 %v54, 0.0
    %v57 = vrsqrt.pop %v55
    %v58 = vmul.f32 %v55, %v57
    %vm59 = vcmp.eq.f32.partialorder %v55, inf
    %v60 = vsel %vm59, %v55, %v58
    %vm61 = vcmp.eq.f32.partialorder %v55, 0.0
    %v62 = vand.u32 %v55, 2147483648
    %v63 = vsel %vm61, %v62, %v60
    %v64 = vrsqrt.pop %v56
    %v65 = vmul.f32 %v56, %v64
    %vm66 = vcmp.eq.f32.partialorder %v56, inf
    %v67 = vsel %vm66, %v56, %v65
    %vm68 = vcmp.eq.f32.partialorder %v56, 0.0
    %v69 = vand.u32 %v56, 2147483648
    %v70 = vsel %vm68, %v69, %v67
    %v71 = vadd.f32 %v63, 0.001
    %v72 = vadd.f32 %v70, 0.001
    %v73 = vrcp.pop %v71
    %v74 = vrcp.pop %v72
    %v75 = vld [vmem:[%s1] sm:$0x1]
    %v76 = vld [vmem:[%s2] sm:$0x1]
    %v77 = vsub.f32 %v29, %v46
    %v78 = vsub.f32 %v30, %v47
    %v79 = vmul.f32 %v77, %v73
    %v80 = vmul.f32 %v78, %v74
    %v82 = vlaneseq
    %v83 = vshrl.u32 %v82, 7
    %v84 = vsub.s32 0, %v83
    %v85 = vrot.slane %v75, %v84
    %v87 = vmul.f32 %v79, %v85
    %v88 = vmul.f32 %v80, %v85
    %v90 = vlaneseq
    %v91 = vshrl.u32 %v90, 7
    %v92 = vsub.s32 0, %v91
    %v93 = vrot.slane %v76, %v92
    %v95 = vadd.f32 %v87, %v93
    %v96 = vadd.f32 %v88, %v93
    %97 = vst.msk [vmem:[#allocation5] sm:$0xff] %vm31, %v95
    %98 = vst.msk [vmem:[#allocation5 + $0x8] sm:$0xff] %vm31, %v96
    // Predicated region
    $region18: #{tpu_custom_call.1} parent=1 // pred_check
      _
    $region19: #{tpu_custom_call.1} parent=1 // pred_check_branch
      %100 = sbr.rel (0) target = $region21
    $region20: #{tpu_custom_call.1} parent=1 // pred_region
      %s102 = ssub.s32 256, 256
      %103 = vsyncadd [#allocation4], %s102
      %s104 = sshll.u32 [#allocation5], 4
      %s105 = int_to_ptr.vmem [resolvable:$true] %s104
      %110 = dma.vmem_to_hbm [thread:$0]  %s105, 256, %s3, [#allocation4], 128, 128, 8
    $region21: #{tpu_custom_call.1} parent=1 // pred_fallthru
      _
    // Predicated region
    $region22: #{tpu_custom_call.1} parent=1 // pred_check
      _
    $region23: #{tpu_custom_call.1} parent=1 // pred_check_branch
      %112 = sbr.rel (0) target = $region25
    $region24: #{tpu_custom_call.1} parent=1 // pred_region
      %113 = dma.done [#allocation4], 256
    $region25: #{tpu_custom_call.1} parent=1 // pred_fallthru
      _
    %114 = vsyncpa [#allocation3], 1
    %115 = vsyncpa [#allocation4], 1

</llo_original>
